<compile_context>
chip_gen: v7x
topology: tpu7x:2x2x1
jax: 0.10.0
libtpu: 0.0.40
codegen_flags: <defaults>
</compile_context>

<pallas_src>
import functools
import math

import jax
import jax.numpy as jnp
from jax import lax
from jax.experimental import pallas as pl
from jax.experimental.pallas import tpu as pltpu


# ---------------------------------------------------------------------------
# im2col producing the *natural* nn.Unfold layout (B, K, L):
#   K = C_in*kh*kw ordered as c*kh*kw + ki*kw + kj   (same as nn.Unfold rows)
#   L = out_h*out_w ordered as oh*out_w + ow         (same as nn.Unfold cols)
# The final reshape merges adjacent dims only -> free (no XLA transpose).
# ---------------------------------------------------------------------------
def _unfold_kl(x, kh, kw, sh, sw, ph, pw):
    B, C, H, W = x.shape
    out_h = (H + 2 * ph - kh) // sh + 1
    out_w = (W + 2 * pw - kw) // sw + 1
    xp = jnp.pad(x, ((0, 0), (0, 0), (ph, ph), (pw, pw)))
    cols = []
    for ki in range(kh):
        for kj in range(kw):
            cols.append(xp[:, :, ki:ki + sh * out_h:sh, kj:kj + sw * out_w:sw])
    patches = jnp.stack(cols, axis=2)                  # (B, C, kh*kw, out_h, out_w)
    return patches.reshape(B, C * kh * kw, out_h * out_w), out_h, out_w


# ---------------------------------------------------------------------------
# Pallas kernel 1: row-tiled fused MLP.  Linear1 has been folded into three
# small vectors:  h = relu(xn*wx + yn*wy + w0),   mlp = h @ w2 + b2
# (w2, b2 arrive pre-scaled by b_scale).  Location coordinates are generated
# in-kernel (no lane-width-1 input streams).
# ---------------------------------------------------------------------------
def _mlp_kernel(w0_ref, wx_ref, wy_ref, w2_ref, b2_ref, out_ref, *, TQ, out_h, out_w):
    # Row ordering r = w_idx*out_h + h_idx reproduces
    # torch.meshgrid(arange(out_w), arange(out_h), indexing='ij').view(-1, 4).
    q = pl.program_id(1)
    r = (q * TQ + lax.broadcasted_iota(jnp.int32, (TQ, 1), 0)).astype(jnp.float32)
    # +0.5 makes the floor robust to reciprocal rounding (r is an exact integer).
    ow = jnp.floor((r + 0.5) * (1.0 / out_h))
    oh = r - ow * out_h
    xn = ow * (1.0 / out_w)
    yn = oh * (1.0 / out_h)
    h = jnp.maximum(xn * wx_ref[...] + yn * wy_ref[...] + w0_ref[...], 0.0)   # (TQ, H)
    # Adjustment magnitudes are tiny (0.1-gain MLP); default MXU precision is fine here.
    out_ref[...] = (jnp.dot(h, w2_ref[...], preferred_element_type=jnp.float32)
                    + b2_ref[...])                                            # (TQ, OC*K)


# ---------------------------------------------------------------------------
# Pallas kernel 2: adjusted-kernel contraction.
#   out[o, l] = sum_k xu[k, l] * kernel[o, k]        (MXU)
#             + sum_k xu[k, l] * adj[k, o, l]        (VPU, adj pre-scaled)
#             + bias[o]
# ---------------------------------------------------------------------------
def _conv_kernel(xu_ref, adj_ref, kern_ref, bias_ref, out_ref, *, K, k_unroll):
    # term1: base-kernel matmul on the MXU (f32-accurate contraction).
    acc = jnp.dot(kern_ref[...], xu_ref[...],
                  preferred_element_type=jnp.float32,
                  precision=lax.Precision.HIGHEST)                    # (TO, TL)

    # term2: per-k lane-dense multiply-add on the VPU; accumulator stays a
    # couple of vregs, no cross-lane reduces, no (TO, tc, kc) intermediates.
    def body(k, a):
        return a + adj_ref[k] * xu_ref[pl.ds(k, 1), :]

    acc = lax.fori_loop(0, K, body, acc, unroll=k_unroll)

    out_ref[...] = acc + bias_ref[...]            # full-block lane-dense store


def _vmem_capacity_bytes():
    try:
        cap = getattr(pltpu.get_tpu_info(), "vmem_capacity_bytes", None)
        if cap:
            return int(cap)
    except Exception:
        pass
    return 64 * 1024 * 1024        # conservative default (v7x per-core VMEM)


# ---------------------------------------------------------------------------
# Forward pass (mirrors SCAConv.forward exactly, including the original
# module's location-scrambling .view(B, OC, L, K).transpose(2, 3))
# ---------------------------------------------------------------------------
def sca_conv_forward(x, params, *, kernel_size, stride, padding, b_scale,
                     condition=False, c=None):
    kh, kw = kernel_size
    sh, sw = stride
    ph, pw = padding
    B = x.shape[0]
    OC, K = params["kernel"].shape

    xu, out_h, out_w = _unfold_kl(x, kh, kw, sh, sw, ph, pw)       # (B, K, L)
    L = out_h * out_w

    # --- fold Linear1 into three small vectors, fold b_scale into Linear2 ---
    w1, b1 = params["w1"], params["b1"]
    w2 = params["w2"] * b_scale                                    # adjustments pre-scaled
    b2 = params["b2"] * b_scale
    H_MLP = w1.shape[1]
    OUT = w2.shape[1]                                              # == OC * K
    cc = c if condition else params["c"]                           # (B_eff, c_len)
    B_eff = cc.shape[0]                                            # 1 when unconditioned
    wx = (w1[0] - w1[1]).reshape(1, H_MLP)
    wy = (w1[2] - w1[3]).reshape(1, H_MLP)
    w0 = ((w1[1] + w1[3]).reshape(1, H_MLP) + b1.reshape(1, H_MLP)
          + cc @ w1[4:]).reshape(B_eff, 1, H_MLP)

    # --- device-derived VMEM budgets ----------------------------------------
    vmem_cap = _vmem_capacity_bytes()
    vmem_limit = min(int(vmem_cap * 0.6), 100 * 1024 * 1024)       # ~38 MiB on v7x, ~77 MiB on v5e/v6e
    ws_budget = vmem_limit // 3                                    # double-buffered block working set

    # --- kernel 1: MLP over location tiles ----------------------------------
    tq_cap = max(8, ws_budget // (2 * OUT * 4) // 8 * 8)
    TQ = min(L, 512, tq_cap)
    if B_eff * pl.cdiv(L, TQ) < 2 and L >= 16:                     # keep both v7x TCs busy
        TQ = max(8, ((L + 1) // 2) // 8 * 8)
    if TQ >= L:
        TQ = L
    n_qt = pl.cdiv(L, TQ)

    mlp_out = pl.pallas_call(
        functools.partial(_mlp_kernel, TQ=TQ, out_h=out_h, out_w=out_w),
        out_shape=jax.ShapeDtypeStruct((B_eff, L, OUT), jnp.float32),
        grid=(B_eff, n_qt),
        in_specs=[
            pl.BlockSpec((None, 1, H_MLP), lambda b, q: (b, 0, 0)),   # w0 (per condition row)
            pl.BlockSpec((1, H_MLP), lambda b, q: (0, 0)),            # wx (resident)
            pl.BlockSpec((1, H_MLP), lambda b, q: (0, 0)),            # wy (resident)
            pl.BlockSpec((H_MLP, OUT), lambda b, q: (0, 0)),          # w2 (resident)
            pl.BlockSpec((1, OUT), lambda b, q: (0, 0)),              # b2 (resident)
        ],
        out_specs=pl.BlockSpec((None, TQ, OUT), lambda b, q: (b, q, 0)),
        compiler_params=pltpu.CompilerParams(
            dimension_semantics=("parallel", "parallel"),
            vmem_limit_bytes=vmem_limit),
    )(w0, wx, wy, w2, b2)

    # The module's scrambling .view(B, OC, L, K) is a *free* reshape of the MLP
    # output; only its last-two-axis transpose (-> K, OC, L; L lane-dense,
    # per-k (OC, L) slabs) is materialized once by XLA.
    adj_t = mlp_out.reshape(B_eff, OC, L, K).transpose(0, 3, 1, 2)   # (B_eff, K, OC, L)

    bias = params.get("bias", None)
    if bias is None:
        bias = jnp.zeros((OC,), jnp.float32)
    bias2d = bias.reshape(OC, 1)

    # --- kernel 2: adjusted conv, tiled over (L, OC, batch) ------------------
    TO = OC if OC <= 8 else min(32, (OC // 8) * 8)
    if L <= 128:
        TL = L
    else:
        TL = min(1024, (L // 128) * 128)

    def _ws_bytes(tl, to):            # xu + adj + out blocks, double-buffered, f32
        return 8 * tl * (K * (to + 2) + to)

    while TL > 128 and _ws_bytes(TL, TO) > ws_budget:
        TL = max(128, (TL // 2) // 128 * 128)
    while TO > 8 and _ws_bytes(TL, TO) > ws_budget:
        TO -= 8

    n_lt, n_ot = pl.cdiv(L, TL), pl.cdiv(OC, TO)
    if n_lt * n_ot < 2 and L >= 256:                               # keep both v7x TCs busy
        TL = max(128, (L // 2) // 128 * 128)
        n_lt = pl.cdiv(L, TL)

    if B_eff == 1:
        adj_map = lambda lt, ot, b: (0, 0, ot, lt)                 # shared across the batch
    else:
        adj_map = lambda lt, ot, b: (b, 0, ot, lt)

    k_unroll = True if K <= 64 else 8

    # NOTE: if the xu fetch ever becomes exposed (only block changing on the
    # innermost batch axis), add pipeline_mode=pl.Buffered(3) on its BlockSpec.
    out = pl.pallas_call(
        functools.partial(_conv_kernel, K=K, k_unroll=k_unroll),
        out_shape=jax.ShapeDtypeStruct((B, OC, L), jnp.float32),
        # batch innermost: adj / kernel / bias blocks stay VMEM-resident across it
        grid=(n_lt, n_ot, B),
        in_specs=[
            pl.BlockSpec((None, K, TL), lambda lt, ot, b: (b, 0, lt)),    # xu (B, K, L)
            pl.BlockSpec((None, K, TO, TL), adj_map),                     # pre-scaled adj
            pl.BlockSpec((TO, K), lambda lt, ot, b: (ot, 0)),             # base kernel
            pl.BlockSpec((TO, 1), lambda lt, ot, b: (ot, 0)),             # bias
        ],
        out_specs=pl.BlockSpec((None, TO, TL), lambda lt, ot, b: (b, ot, lt)),
        compiler_params=pltpu.CompilerParams(
            dimension_semantics=("parallel", "parallel", "arbitrary"),
            vmem_limit_bytes=vmem_limit),
    )(xu, adj_t, params["kernel"], bias2d)

    return out.reshape(B, OC, out_h, out_w)


# ---------------------------------------------------------------------------
# Pure-JAX reference (direct transcription of the PyTorch forward)
# ---------------------------------------------------------------------------
def sca_conv_reference(x, params, *, kernel_size, stride, padding, b_scale,
                       condition=False, c=None):
    kh, kw = kernel_size
    sh, sw = stride
    ph, pw = padding
    B = x.shape[0]
    OC, K = params["kernel"].shape
    xu, out_h, out_w = _unfold_kl(x, kh, kw, sh, sw, ph, pw)       # (B, K, L)
    L = out_h * out_w
    gx, gy = jnp.meshgrid(jnp.arange(out_w), jnp.arange(out_h), indexing="ij")
    xn = gx.astype(jnp.float32) / out_w
    yn = gy.astype(jnp.float32) / out_h
    loc = jnp.stack([xn, 1.0 - xn, yn, 1.0 - yn], axis=-1).reshape(-1, 4)
    loc = jnp.broadcast_to(loc[None], (B, L, 4))
    cc = c if condition else params["c"]
    ccb = jnp.broadcast_to(cc[:, None, :], (B, L, cc.shape[1]))
    feat = jnp.concatenate([loc, ccb], axis=-1).reshape(B * L, -1)
    h = jnp.maximum(feat @ params["w1"] + params["b1"], 0.0)
    mlp_out = h @ params["w2"] + params["b2"]
    adj = mlp_out.reshape(B, OC, L, K).transpose(0, 1, 3, 2)
    adjusted = params["kernel"][None, :, :, None] + b_scale * adj
    out = jnp.einsum("bik,boik->bok", xu, adjusted,
                     precision=jax.lax.Precision.HIGHEST)
    bias = params.get("bias", None)
    if bias is not None:
        out = out + bias[None, :, None]
    return out.reshape(B, OC, out_h, out_w)


if __name__ == "__main__":
    B, C_IN, H, W = 2, 4, 16, 16
    OC = 8
    KS, STRIDE, PAD = (3, 3), (1, 1), (1, 1)
    C_LEN, MLP_HIDDEN, B_SCALE = 8, 16, 1.0
    K = C_IN * KS[0] * KS[1]
    F = 4 + C_LEN

    key = jax.random.PRNGKey(0)
    kx, kk, kb, kc, kw1, kw2 = jax.random.split(key, 6)

    x = jax.random.normal(kx, (B, C_IN, H, W), dtype=jnp.float32)

    kern_bound = math.sqrt(6.0 / (K + OC))
    w1_bound = 0.1 * math.sqrt(6.0 / (F + MLP_HIDDEN))
    w2_bound = 0.1 * math.sqrt(6.0 / (MLP_HIDDEN + OC * K))
    params = {
        "kernel": jax.random.uniform(kk, (OC, K), minval=-kern_bound,
                                     maxval=kern_bound, dtype=jnp.float32),
        "bias": jax.random.normal(kb, (OC,), dtype=jnp.float32),
        "c": jax.random.normal(kc, (1, C_LEN), dtype=jnp.float32),
        # nn.Linear stores (out, in); we store the transposed (in, out) layout.
        "w1": jax.random.uniform(kw1, (F, MLP_HIDDEN), minval=-w1_bound,
                                 maxval=w1_bound, dtype=jnp.float32),
        "b1": jnp.zeros((1, MLP_HIDDEN), dtype=jnp.float32),
        "w2": jax.random.uniform(kw2, (MLP_HIDDEN, OC * K), minval=-w2_bound,
                                 maxval=w2_bound, dtype=jnp.float32),
        "b2": jnp.zeros((1, OC * K), dtype=jnp.float32),
    }

    out = sca_conv_forward(x, params, kernel_size=KS, stride=STRIDE, padding=PAD,
                           b_scale=B_SCALE)
    out = jax.block_until_ready(out)

    ref = sca_conv_reference(x, params, kernel_size=KS, stride=STRIDE, padding=PAD,
                             b_scale=B_SCALE)
    ref = jax.block_until_ready(ref)

    assert out.shape == (B, OC, 16, 16), out.shape
    max_err = float(jnp.max(jnp.abs(out - ref)))
    assert jnp.allclose(out, ref, atol=2e-3, rtol=2e-3), max_err
    print("KERNEL_OK")
</pallas_src>

<mosaic_0001>
module attributes {stable_mosaic.version = 11 : i64} {
  func.func @_mlp_kernel(%arg0: i32, %arg1: i32, %arg2: memref<1x1x16xf32, #tpu.memory_space<vmem>>, %arg3: memref<1x16xf32, #tpu.memory_space<vmem>>, %arg4: memref<1x16xf32, #tpu.memory_space<vmem>>, %arg5: memref<16x288xf32, #tpu.memory_space<vmem>>, %arg6: memref<1x288xf32, #tpu.memory_space<vmem>>, %arg7: memref<1x128x288xf32, #tpu.memory_space<vmem>>) attributes {dimension_semantics = [#tpu.dimension_semantics<parallel>, #tpu.dimension_semantics<parallel>], iteration_bounds = array<i64: 1, 2>, scalar_prefetch = 0 : i64, scratch_operands = 0 : i64, tpu.core_type = #tpu.core_type<tc>, window_params = [{transform_indices = @transform_0, window_bounds = array<i64: 1, 1, 16>}, {pipeline_mode = #tpu.pipeline_mode<synchronous>, transform_indices = @transform_1, window_bounds = array<i64: 1, 16>}, {pipeline_mode = #tpu.pipeline_mode<synchronous>, transform_indices = @transform_2, window_bounds = array<i64: 1, 16>}, {pipeline_mode = #tpu.pipeline_mode<synchronous>, transform_indices = @transform_3, window_bounds = array<i64: 16, 288>}, {pipeline_mode = #tpu.pipeline_mode<synchronous>, transform_indices = @transform_4, window_bounds = array<i64: 1, 288>}, {transform_indices = @transform_5, window_bounds = array<i64: 1, 128, 288>}]} {
    %c128_i32 = arith.constant 128 : i32
    %0 = arith.muli %arg1, %c128_i32 : i32
    %1 = tpu.iota {dimensions = array<i32: 0>} : vector<128x1xi32>
    %2 = vector.broadcast %0 : i32 to vector<128x1xi32>
    %3 = arith.addi %2, %1 : vector<128x1xi32>
    %4 = arith.sitofp %3 : vector<128x1xi32> to vector<128x1xf32>
    %cst = arith.constant 5.000000e-01 : f32
    %5 = vector.broadcast %cst : f32 to vector<128x1xf32>
    %6 = arith.addf %4, %5 : vector<128x1xf32>
    %cst_0 = arith.constant 6.250000e-02 : f32
    %7 = vector.broadcast %cst_0 : f32 to vector<128x1xf32>
    %8 = arith.mulf %6, %7 : vector<128x1xf32>
    %9 = math.floor %8 : vector<128x1xf32>
    %cst_1 = arith.constant 1.600000e+01 : f32
    %10 = vector.broadcast %cst_1 : f32 to vector<128x1xf32>
    %11 = arith.mulf %9, %10 : vector<128x1xf32>
    %12 = arith.subf %4, %11 : vector<128x1xf32>
    %cst_2 = arith.constant 6.250000e-02 : f32
    %13 = vector.broadcast %cst_2 : f32 to vector<128x1xf32>
    %14 = arith.mulf %9, %13 : vector<128x1xf32>
    %cst_3 = arith.constant 6.250000e-02 : f32
    %15 = vector.broadcast %cst_3 : f32 to vector<128x1xf32>
    %16 = arith.mulf %12, %15 : vector<128x1xf32>
    %c0 = arith.constant 0 : index
    %c0_4 = arith.constant 0 : index
    %17 = vector.load %arg3[%c0, %c0_4] : memref<1x16xf32, #tpu.memory_space<vmem>>, vector<1x16xf32>
    %18 = vector.broadcast %14 : vector<128x1xf32> to vector<128x16xf32>
    %19 = vector.broadcast %17 : vector<1x16xf32> to vector<128x16xf32>
    %20 = arith.mulf %18, %19 : vector<128x16xf32>
    %c0_5 = arith.constant 0 : index
    %c0_6 = arith.constant 0 : index
    %21 = vector.load %arg4[%c0_5, %c0_6] : memref<1x16xf32, #tpu.memory_space<vmem>>, vector<1x16xf32>
    %22 = vector.broadcast %16 : vector<128x1xf32> to vector<128x16xf32>
    %23 = vector.broadcast %21 : vector<1x16xf32> to vector<128x16xf32>
    %24 = arith.mulf %22, %23 : vector<128x16xf32>
    %25 = arith.addf %20, %24 : vector<128x16xf32>
    %c0_7 = arith.constant 0 : index
    %c0_8 = arith.constant 0 : index
    %c0_9 = arith.constant 0 : index
    %26 = vector.load %arg2[%c0_7, %c0_8, %c0_9] : memref<1x1x16xf32, #tpu.memory_space<vmem>>, vector<1x1x16xf32>
    %27 = vector.shape_cast %26 : vector<1x1x16xf32> to vector<1x16xf32>
    %28 = vector.broadcast %27 : vector<1x16xf32> to vector<128x16xf32>
    %29 = arith.addf %25, %28 : vector<128x16xf32>
    %cst_10 = arith.constant 0.000000e+00 : f32
    %30 = vector.broadcast %cst_10 : f32 to vector<128x16xf32>
    %31 = arith.maximumf %29, %30 : vector<128x16xf32>
    %c0_11 = arith.constant 0 : index
    %c0_12 = arith.constant 0 : index
    %32 = vector.load %arg5[%c0_11, %c0_12] : memref<16x288xf32, #tpu.memory_space<vmem>>, vector<16x288xf32>
    %cst_13 = arith.constant dense<0.000000e+00> : vector<128x288xf32>
    %33 = tpu.matmul %31, %32, %cst_13 {dimension_numbers = #tpu.dot_dimension_numbers<[1], [0], [0], [1], [0, 0, 1, 1], [], []>} : vector<128x16xf32>, vector<16x288xf32>, vector<128x288xf32> -> vector<128x288xf32>
    %c0_14 = arith.constant 0 : index
    %c0_15 = arith.constant 0 : index
    %34 = vector.load %arg6[%c0_14, %c0_15] : memref<1x288xf32, #tpu.memory_space<vmem>>, vector<1x288xf32>
    %35 = vector.broadcast %34 : vector<1x288xf32> to vector<128x288xf32>
    %36 = arith.addf %33, %35 : vector<128x288xf32>
    %c0_16 = arith.constant 0 : index
    %c0_17 = arith.constant 0 : index
    %c0_18 = arith.constant 0 : index
    %37 = vector.load %arg7[%c0_16, %c0_17, %c0_18] : memref<1x128x288xf32, #tpu.memory_space<vmem>>, vector<1x128x288xf32>
    %38 = vector.shape_cast %37 : vector<1x128x288xf32> to vector<128x288xf32>
    %39 = vector.shape_cast %36 : vector<128x288xf32> to vector<1x128x288xf32>
    tpu.vector_store %arg7[%c0_16, %c0_17, %c0_18], %39 {strides = array<i32>} : memref<1x128x288xf32, #tpu.memory_space<vmem>>, vector<1x128x288xf32>,
    return
  }
  func.func @transform_0(%arg0: i32, %arg1: i32) -> (i32, i32, i32) {
    %c0_i32 = arith.constant 0 : i32
    %c0_i32_0 = arith.constant 0 : i32
    %c0_i32_1 = arith.constant 0 : i32
    return %arg0, %c0_i32, %c0_i32_0 : i32, i32, i32
  }
  func.func @transform_1(%arg0: i32, %arg1: i32) -> (i32, i32) {
    %c0_i32 = arith.constant 0 : i32
    %c0_i32_0 = arith.constant 0 : i32
    %c0_i32_1 = arith.constant 0 : i32
    return %c0_i32, %c0_i32_0 : i32, i32
  }
  func.func @transform_2(%arg0: i32, %arg1: i32) -> (i32, i32) {
    %c0_i32 = arith.constant 0 : i32
    %c0_i32_0 = arith.constant 0 : i32
    %c0_i32_1 = arith.constant 0 : i32
    return %c0_i32, %c0_i32_0 : i32, i32
  }
  func.func @transform_3(%arg0: i32, %arg1: i32) -> (i32, i32) {
    %c0_i32 = arith.constant 0 : i32
    %c0_i32_0 = arith.constant 0 : i32
    %c0_i32_1 = arith.constant 0 : i32
    return %c0_i32, %c0_i32_0 : i32, i32
  }
  func.func @transform_4(%arg0: i32, %arg1: i32) -> (i32, i32) {
    %c0_i32 = arith.constant 0 : i32
    %c0_i32_0 = arith.constant 0 : i32
    %c0_i32_1 = arith.constant 0 : i32
    return %c0_i32, %c0_i32_0 : i32, i32
  }
  func.func @transform_5(%arg0: i32, %arg1: i32) -> (i32, i32, i32) {
    %c0_i32 = arith.constant 0 : i32
    %c0_i32_0 = arith.constant 0 : i32
    return %arg0, %arg1, %c0_i32 : i32, i32, i32
  }
}

</mosaic_0001>

<llo_original>
// kernel: tpu_custom_call.1
$region0: #{tpu_custom_call.1}
  #allocation0 [shape = 'u32[]', space=smem, size = 0x4, offset = 0x4, fixed_abs, tag = 'smem constant byte address 0x4 - core index']
  #allocation1 [shape = 'u32[144,128]{1,0:T(1,128)}', space=vmem, size = 0x12000, scoped, tag = 'internal scratch']
  %s0 = inlined_call_operand.hbm [shape: f32[1,1,16], index: 0, kind: input, shape index: {}]
  %s1 = inlined_call_operand.vmem [shape: f32[1,16], index: 1, kind: input, shape index: {}]
  %s2 = inlined_call_operand.vmem [shape: f32[1,16], index: 2, kind: input, shape index: {}]
  %s3 = inlined_call_operand.hbm [shape: f32[16,288], index: 3, kind: input, shape index: {}]
  %s4 = inlined_call_operand.vmem [shape: f32[1,288], index: 4, kind: input, shape index: {}]
  %s5 = inlined_call_operand.vmem [shape: f32[1,256,288], index: 5, kind: output, shape index: {}]
  %s6 = sld [smem:[#allocation0]]
  $region61: #{tpu_custom_call.1} parent=0
    _
  %s8 = ssub.s32 1, %s6
  %s9 = scalar_select 0, %s8, %s6
  $region1: #{tpu_custom_call.1} parent=0
    #allocation2 [shape = 'u8[512]{0}', space=vmem, size = 0x400, scoped, tag = 'input window, operand 0, single buffered']
    #allocation3 [shape = 's32[2]{0}', space=sflag, size = 0x8, scoped, tag = 'scoped memory for tpu_custom_call.1']
    #allocation4 [shape = 'u8[24576]{0}', space=vmem, size = 0x6000, scoped, tag = 'input window, operand 3, single buffered']
    #allocation5 [shape = 's32[1]{0}', space=sflag, size = 0x4, scoped, tag = 'scoped memory for tpu_custom_call.1']
    %10 = vsyncpa [#allocation3], 0
    %11 = vsyncpa [#allocation5], 0
    loop: start=0, step=1, limit=4
    $region2: #{tpu_custom_call.1} parent=1 // loop_pre_header
      _
    $region3: #{tpu_custom_call.1} parent=1 // loop_header
      %s13 = sphi 0, %s17
      %p14 = scmp.ge.s32.totalorder %s13, 4
      %s20 = sphi 0, %s32
      %s21 = sphi 0, %s28
      %s22 = sphi 0, %s20
      %s23 = sphi 0, %s21
      %s24 = sphi 0, %s22
      %s25 = sphi 0, %s23
      %s35 = sphi 0, %s37
      %s38 = sphi 0, %s35
      %s39 = sphi 0, %s38
      %s55 = sphi 0, %s39
      %s59 = sphi 0, %s59
      %s61 = sphi 0, %s59
      %s62 = sphi 0, %s61
      %s76 = sphi 0, %s62
      %s80 = sphi 0, %s80
      %s82 = sphi 0, %s80
      %s83 = sphi 0, %s82
      %s97 = sphi 0, %s83
      %s101 = sphi 0, %s101
      %s103 = sphi 0, %s101
      %s104 = sphi 0, %s103
      %s118 = sphi 0, %s104
      %s122 = sphi 0, %s122
      %s124 = sphi 0, %s122
      %s125 = sphi 0, %s124
      %s139 = sphi 0, %s125
      %s147 = sphi 0, %s149
      %s150 = sphi 0, %s147
      %s151 = sphi 0, %s150
      %s167 = sphi 0, %s151
    $region4: #{tpu_custom_call.1} parent=1 // loop_header_branch
      %16 = sbr.rel (%p14) target = $region8
    $region5: #{tpu_custom_call.1} parent=1 // loop_body
      %s18 = ssub.s32 %s13, 1
      %s19 = ssub.s32 %s13, 2
      %s26 = sadd.s32 1, %s21
      %p27 = scmp.ge.s32.totalorder %s26, 2
      %s28 = scalar_select %p27, 0, %s26
      %s29 = sadd.s32 1, %s20
      %s30 = scalar_select %p27, %s29, %s20
      %p31 = scmp.ge.s32.totalorder %s30, 1
      %s32 = scalar_select %p31, 0, %s30
      %s33 = ssub.s32 %s20, %s32
      %p34 = scmp.eq.s32.totalorder %s33, 0
      %s36 = sadd.s32 %s35, 1
      %s37 = scalar_select %p34, %s35, %s36
      %p40 = pneg %p34
      %p41 = scmp.eq.s32.totalorder %s13, 1
      %p42 = por %p40, %p41
      %p43 = scmp.ne.s32.totalorder %s35, %s38
      %p44 = scmp.eq.s32.totalorder %s13, 0
      %p45 = por %p43, %p44
      %p46 = scmp.ne.s32.totalorder %s35, %s38
      %p47 = scmp.eq.s32.totalorder %s18, 1
      %p48 = por %p46, %p47
      %p49 = scmp.ne.s32.totalorder %s38, %s39
      %p50 = scmp.eq.s32.totalorder %s18, 0
      %p51 = por %p49, %p50
      %p52 = scmp.ne.s32.totalorder %s38, %s39
      %p53 = scmp.eq.s32.totalorder %s19, 1
      %p54 = por %p52, %p53
      %p56 = scmp.ne.s32.totalorder %s39, %s55
      %p57 = scmp.eq.s32.totalorder %s19, 0
      %p58 = por %p56, %p57
      %s60 = sadd.s32 %s59, 1
      %p63 = scmp.eq.s32.totalorder %s13, 1
      %p64 = scmp.ne.s32.totalorder %s59, %s61
      %p65 = scmp.eq.s32.totalorder %s13, 0
      %p66 = por %p64, %p65
      %p67 = scmp.ne.s32.totalorder %s59, %s61
      %p68 = scmp.eq.s32.totalorder %s18, 1
      %p69 = por %p67, %p68
      %p70 = scmp.ne.s32.totalorder %s61, %s62
      %p71 = scmp.eq.s32.totalorder %s18, 0
      %p72 = por %p70, %p71
      %p73 = scmp.ne.s32.totalorder %s61, %s62
      %p74 = scmp.eq.s32.totalorder %s19, 1
      %p75 = por %p73, %p74
      %p77 = scmp.ne.s32.totalorder %s62, %s76
      %p78 = scmp.eq.s32.totalorder %s19, 0
      %p79 = por %p77, %p78
      %s81 = sadd.s32 %s80, 1
      %p84 = scmp.eq.s32.totalorder %s13, 1
      %p85 = scmp.ne.s32.totalorder %s80, %s82
      %p86 = scmp.eq.s32.totalorder %s13, 0
      %p87 = por %p85, %p86
      %p88 = scmp.ne.s32.totalorder %s80, %s82
      %p89 = scmp.eq.s32.totalorder %s18, 1
      %p90 = por %p88, %p89
      %p91 = scmp.ne.s32.totalorder %s82, %s83
      %p92 = scmp.eq.s32.totalorder %s18, 0
      %p93 = por %p91, %p92
      %p94 = scmp.ne.s32.totalorder %s82, %s83
      %p95 = scmp.eq.s32.totalorder %s19, 1
      %p96 = por %p94, %p95
      %p98 = scmp.ne.s32.totalorder %s83, %s97
      %p99 = scmp.eq.s32.totalorder %s19, 0
      %p100 = por %p98, %p99
      %s102 = sadd.s32 %s101, 1
      %p105 = scmp.eq.s32.totalorder %s13, 1
      %p106 = scmp.ne.s32.totalorder %s101, %s103
      %p107 = scmp.eq.s32.totalorder %s13, 0
      %p108 = por %p106, %p107
      %p109 = scmp.ne.s32.totalorder %s101, %s103
      %p110 = scmp.eq.s32.totalorder %s18, 1
      %p111 = por %p109, %p110
      %p112 = scmp.ne.s32.totalorder %s103, %s104
      %p113 = scmp.eq.s32.totalorder %s18, 0
      %p114 = por %p112, %p113
      %p115 = scmp.ne.s32.totalorder %s103, %s104
      %p116 = scmp.eq.s32.totalorder %s19, 1
      %p117 = por %p115, %p116
      %p119 = scmp.ne.s32.totalorder %s104, %s118
      %p120 = scmp.eq.s32.totalorder %s19, 0
      %p121 = por %p119, %p120
      %s123 = sadd.s32 %s122, 1
      %p126 = scmp.eq.s32.totalorder %s13, 1
      %p127 = scmp.ne.s32.totalorder %s122, %s124
      %p128 = scmp.eq.s32.totalorder %s13, 0
      %p129 = por %p127, %p128
      %p130 = scmp.ne.s32.totalorder %s122, %s124
      %p131 = scmp.eq.s32.totalorder %s18, 1
      %p132 = por %p130, %p131
      %p133 = scmp.ne.s32.totalorder %s124, %s125
      %p134 = scmp.eq.s32.totalorder %s18, 0
      %p135 = por %p133, %p134
      %p136 = scmp.ne.s32.totalorder %s124, %s125
      %p137 = scmp.eq.s32.totalorder %s19, 1
      %p138 = por %p136, %p137
      %p140 = scmp.ne.s32.totalorder %s125, %s139
      %p141 = scmp.eq.s32.totalorder %s19, 0
      %p142 = por %p140, %p141
      %s143 = ssub.s32 %s20, %s32
      %s144 = ssub.s32 %s21, %s28
      %s145 = sor.u32 %s143, %s144
      %p146 = scmp.eq.s32.totalorder %s145, 0
      %s148 = sadd.s32 %s147, 1
      %s149 = scalar_select %p146, %s147, %s148
      %p152 = pneg %p146
      %p153 = scmp.eq.s32.totalorder %s13, 1
      %p154 = por %p152, %p153
      %p155 = scmp.ne.s32.totalorder %s147, %s150
      %p156 = scmp.eq.s32.totalorder %s13, 0
      %p157 = por %p155, %p156
      %p158 = scmp.ne.s32.totalorder %s147, %s150
      %p159 = scmp.eq.s32.totalorder %s18, 1
      %p160 = por %p158, %p159
      %p161 = scmp.ne.s32.totalorder %s150, %s151
      %p162 = scmp.eq.s32.totalorder %s18, 0
      %p163 = por %p161, %p162
      %p164 = scmp.ne.s32.totalorder %s150, %s151
      %p165 = scmp.eq.s32.totalorder %s19, 1
      %p166 = por %p164, %p165
      %p168 = scmp.ne.s32.totalorder %s151, %s167
      %p169 = scmp.eq.s32.totalorder %s19, 0
      %p170 = por %p168, %p169
      %p171 = scmp.le.s32.totalorder 1, %s13
      %p172 = scmp.lt.s32.totalorder %s13, 3
      %p173 = pnand %p171, %p172
      %p174 = pneg %p173
      // Predicated region
      $region9: #{tpu_custom_call.1} parent=5 // pred_check
        _
      $region10: #{tpu_custom_call.1} parent=5 // pred_check_branch
        %176 = sbr.rel (%p173) target = $region12
      $region11: #{tpu_custom_call.1} parent=5 // pred_region
        %s177 = ssub.s32 %s13, 1
        // Predicated region
        $region13: #{tpu_custom_call.1} parent=11 // pred_check
          %p178 = pneg %p51
        $region14: #{tpu_custom_call.1} parent=11 // pred_check_branch
          %180 = sbr.rel (%p178) target = $region16
        $region15: #{tpu_custom_call.1} parent=11 // pred_region
          %s182 = ssub.s32 16, 16
          %183 = vsyncadd [#allocation3], %s182
          %s184 = smul.addr %s22, 16
          %s185 = scalar_lea.hbm %s0, %s184
          %s187 = sshll.u32 [#allocation2], 4
          %s188 = int_to_ptr.vmem [resolvable:$true] %s187
          %190 = dma.hbm_to_vmem [thread:$0]  %s185, 16, %s188, [#allocation3]
        $region16: #{tpu_custom_call.1} parent=11 // pred_fallthru
          _
        // Predicated region
        $region17: #{tpu_custom_call.1} parent=11 // pred_check
          %p191 = pneg %p72
        $region18: #{tpu_custom_call.1} parent=11 // pred_check_branch
          %193 = sbr.rel (%p191) target = $region20
        $region19: #{tpu_custom_call.1} parent=11 // pred_region
          _
        $region20: #{tpu_custom_call.1} parent=11 // pred_fallthru
          _
        // Predicated region
        $region21: #{tpu_custom_call.1} parent=11 // pred_check
          %p194 = pneg %p93
        $region22: #{tpu_custom_call.1} parent=11 // pred_check_branch
          %196 = sbr.rel (%p194) target = $region24
        $region23: #{tpu_custom_call.1} parent=11 // pred_region
          _
        $region24: #{tpu_custom_call.1} parent=11 // pred_fallthru
          _
        // Predicated region
        $region25: #{tpu_custom_call.1} parent=11 // pred_check
          %p197 = pneg %p114
        $region26: #{tpu_custom_call.1} parent=11 // pred_check_branch
          %199 = sbr.rel (%p197) target = $region28
        $region27: #{tpu_custom_call.1} parent=11 // pred_region
          %s201 = ssub.s32 768, 768
          %202 = vsyncadd [#allocation5], %s201
          %s203 = sshll.u32 [#allocation4], 4
          %s204 = int_to_ptr.vmem [resolvable:$true] %s203
          %209 = dma.hbm_to_vmem [thread:$0]  %s3, 768, %s204, [#allocation5], 384, 384, 24
        $region28: #{tpu_custom_call.1} parent=11 // pred_fallthru
          _
        // Predicated region
        $region29: #{tpu_custom_call.1} parent=11 // pred_check
          %p210 = pneg %p135
        $region30: #{tpu_custom_call.1} parent=11 // pred_check_branch
          %212 = sbr.rel (%p210) target = $region32
        $region31: #{tpu_custom_call.1} parent=11 // pred_region
          _
        $region32: #{tpu_custom_call.1} parent=11 // pred_fallthru
          _
      $region12: #{tpu_custom_call.1} parent=5 // pred_fallthru
        _
      %p213 = scmp.lt.s32.totalorder %s13, 2
      // Predicated region
      $region33: #{tpu_custom_call.1} parent=5 // pred_check
        %p214 = pneg %p213
      $region34: #{tpu_custom_call.1} parent=5 // pred_check_branch
        %216 = sbr.rel (%p214) target = $region36
      $region35: #{tpu_custom_call.1} parent=5 // pred_region
        _
      $region36: #{tpu_custom_call.1} parent=5 // pred_fallthru
        _
      %p217 = scmp.le.s32.totalorder 1, %s13
      %p218 = scmp.lt.s32.totalorder %s13, 3
      %p219 = pnand %p217, %p218
      %p220 = pneg %p219
      // Predicated region
      $region37: #{tpu_custom_call.1} parent=5 // pred_check
        _
      $region38: #{tpu_custom_call.1} parent=5 // pred_check_branch
        %222 = sbr.rel (%p219) target = $region40
      $region39: #{tpu_custom_call.1} parent=5 // pred_region
        %s223 = ssub.s32 %s13, 1
        // Predicated region
        $region41: #{tpu_custom_call.1} parent=39 // pred_check
          %p224 = pneg %p51
        $region42: #{tpu_custom_call.1} parent=39 // pred_check_branch
          %226 = sbr.rel (%p224) target = $region44
        $region43: #{tpu_custom_call.1} parent=39 // pred_region
          %227 = dma.done [#allocation3], 16
        $region44: #{tpu_custom_call.1} parent=39 // pred_fallthru
          _
        // Predicated region
        $region45: #{tpu_custom_call.1} parent=39 // pred_check
          %p228 = pneg %p114
        $region46: #{tpu_custom_call.1} parent=39 // pred_check_branch
          %230 = sbr.rel (%p228) target = $region48
        $region47: #{tpu_custom_call.1} parent=39 // pred_region
          %231 = dma.done [#allocation5], 768
        $region48: #{tpu_custom_call.1} parent=39 // pred_fallthru
          _
        %p232 = pneg %p51
        %p233 = pneg %p48
        %p234 = pneg %p72
        %p235 = pneg %p69
        %p236 = pneg %p93
        %p237 = pneg %p90
        %p238 = pneg %p114
        %p239 = pneg %p111
        %p240 = pneg %p135
        %p241 = pneg %p132
        %p242 = pneg %p163
        %p243 = pneg %p160
        %s244 = smul.u32 16, %s23
        %p245 = scmp.lt.s32.totalorder %s22, 0
        %s246 = scalar_select %p245, %s22, 0
        %p247 = scmp.lt.s32.totalorder %s244, 31
        %s248 = scalar_select %p247, %s244, 31
        %s249 = smul.addr %s248, 3
        %s250 = smul.addr %s246, 96
        %s251 = sadd.s32 %s249, %s250
        %s252 = smul.addr %s251, 8
        %s253 = scalar_lea.vmem %s5, %s252
        %s254 = smul.u32 16, %s23
        %p255 = scmp.lt.s32.totalorder %s22, 0
        %s256 = scalar_select %p255, %s22, 0
        %p257 = scmp.lt.s32.totalorder %s254, 31
        %s258 = scalar_select %p257, %s254, 31
        %s259 = smul.addr %s258, 3
        %s260 = smul.addr %s256, 96
        %s261 = sadd.s32 %s259, %s260
        %s262 = smul.addr %s261, 8
        %s263 = scalar_lea.vmem %s5, %s262
        %s264 = smul.u32 16, %s23
        %s265 = smul.u32 %s23, 128
        %v266 = vlaneseq
        %v267 = vshrl.u32 %v266, 7
        %v268 = vadd.s32 %v267, 8
        %v269 = vadd.s32 %v267, 16
        %v270 = vadd.s32 %v267, 24
        %v271 = vadd.s32 %v267, 32
        %v272 = vadd.s32 %v267, 40
        %v273 = vadd.s32 %v267, 48
        %v274 = vadd.s32 %v267, 56
        %v275 = vadd.s32 %v267, 64
        %v276 = vadd.s32 %v267, 72
        %v277 = vadd.s32 %v267, 80
        %v278 = vadd.s32 %v267, 88
        %v279 = vadd.s32 %v267, 96
        %v280 = vadd.s32 %v267, 104
        %v281 = vadd.s32 %v267, 112
        %v282 = vadd.s32 %v267, 120
        %v283 = vstv %s265
        %v284 = vadd.s32 %v283, %v267
        %v285 = vadd.s32 %v283, %v268
        %v286 = vadd.s32 %v283, %v269
        %v287 = vadd.s32 %v283, %v270
        %v288 = vadd.s32 %v283, %v271
        %v289 = vadd.s32 %v283, %v272
        %v290 = vadd.s32 %v283, %v273
        %v291 = vadd.s32 %v283, %v274
        %v292 = vadd.s32 %v283, %v275
        %v293 = vadd.s32 %v283, %v276
        %v294 = vadd.s32 %v283, %v277
        %v295 = vadd.s32 %v283, %v278
        %v296 = vadd.s32 %v283, %v279
        %v297 = vadd.s32 %v283, %v280
        %v298 = vadd.s32 %v283, %v281
        %v299 = vadd.s32 %v283, %v282
        %v300 = vcvt.s32.f32 %v284
        %v301 = vcvt.s32.f32 %v285
        %v302 = vcvt.s32.f32 %v286
        %v303 = vcvt.s32.f32 %v287
        %v304 = vcvt.s32.f32 %v288
        %v305 = vcvt.s32.f32 %v289
        %v306 = vcvt.s32.f32 %v290
        %v307 = vcvt.s32.f32 %v291
        %v308 = vcvt.s32.f32 %v292
        %v309 = vcvt.s32.f32 %v293
        %v310 = vcvt.s32.f32 %v294
        %v311 = vcvt.s32.f32 %v295
        %v312 = vcvt.s32.f32 %v296
        %v313 = vcvt.s32.f32 %v297
        %v314 = vcvt.s32.f32 %v298
        %v315 = vcvt.s32.f32 %v299
        %v316 = vadd.f32 %v300, 0.5
        %v317 = vadd.f32 %v301, 0.5
        %v318 = vadd.f32 %v302, 0.5
        %v319 = vadd.f32 %v303, 0.5
        %v320 = vadd.f32 %v304, 0.5
        %v321 = vadd.f32 %v305, 0.5
        %v322 = vadd.f32 %v306, 0.5
        %v323 = vadd.f32 %v307, 0.5
        %v324 = vadd.f32 %v308, 0.5
        %v325 = vadd.f32 %v309, 0.5
        %v326 = vadd.f32 %v310, 0.5
        %v327 = vadd.f32 %v311, 0.5
        %v328 = vadd.f32 %v312, 0.5
        %v329 = vadd.f32 %v313, 0.5
        %v330 = vadd.f32 %v314, 0.5
        %v331 = vadd.f32 %v315, 0.5
        %v332 = vmul.f32 %v316, 0.0625
        %v333 = vmul.f32 %v317, 0.0625
        %v334 = vmul.f32 %v318, 0.0625
        %v335 = vmul.f32 %v319, 0.0625
        %v336 = vmul.f32 %v320, 0.0625
        %v337 = vmul.f32 %v321, 0.0625
        %v338 = vmul.f32 %v322, 0.0625
        %v339 = vmul.f32 %v323, 0.0625
        %v340 = vmul.f32 %v324, 0.0625
        %v341 = vmul.f32 %v325, 0.0625
        %v342 = vmul.f32 %v326, 0.0625
        %v343 = vmul.f32 %v327, 0.0625
        %v344 = vmul.f32 %v328, 0.0625
        %v345 = vmul.f32 %v329, 0.0625
        %v346 = vmul.f32 %v330, 0.0625
        %v347 = vmul.f32 %v331, 0.0625
        %v348 = vfloor.f32 %v332
        %v349 = vfloor.f32 %v333
        %v350 = vfloor.f32 %v334
        %v351 = vfloor.f32 %v335
        %v352 = vfloor.f32 %v336
        %v353 = vfloor.f32 %v337
        %v354 = vfloor.f32 %v338
        %v355 = vfloor.f32 %v339
        %v356 = vfloor.f32 %v340
        %v357 = vfloor.f32 %v341
        %v358 = vfloor.f32 %v342
        %v359 = vfloor.f32 %v343
        %v360 = vfloor.f32 %v344
        %v361 = vfloor.f32 %v345
        %v362 = vfloor.f32 %v346
        %v363 = vfloor.f32 %v347
        %v364 = vmul.f32 %v348, 16.0
        %v365 = vmul.f32 %v349, 16.0
        %v366 = vmul.f32 %v350, 16.0
        %v367 = vmul.f32 %v351, 16.0
        %v368 = vmul.f32 %v352, 16.0
        %v369 = vmul.f32 %v353, 16.0
        %v370 = vmul.f32 %v354, 16.0
        %v371 = vmul.f32 %v355, 16.0
        %v372 = vmul.f32 %v356, 16.0
        %v373 = vmul.f32 %v357, 16.0
        %v374 = vmul.f32 %v358, 16.0
        %v375 = vmul.f32 %v359, 16.0
        %v376 = vmul.f32 %v360, 16.0
        %v377 = vmul.f32 %v361, 16.0
        %v378 = vmul.f32 %v362, 16.0
        %v379 = vmul.f32 %v363, 16.0
        %v380 = vsub.f32 %v300, %v364
        %v381 = vsub.f32 %v301, %v365
        %v382 = vsub.f32 %v302, %v366
        %v383 = vsub.f32 %v303, %v367
        %v384 = vsub.f32 %v304, %v368
        %v385 = vsub.f32 %v305, %v369
        %v386 = vsub.f32 %v306, %v370
        %v387 = vsub.f32 %v307, %v371
        %v388 = vsub.f32 %v308, %v372
        %v389 = vsub.f32 %v309, %v373
        %v390 = vsub.f32 %v310, %v374
        %v391 = vsub.f32 %v311, %v375
        %v392 = vsub.f32 %v312, %v376
        %v393 = vsub.f32 %v313, %v377
        %v394 = vsub.f32 %v314, %v378
        %v395 = vsub.f32 %v315, %v379
        %v396 = vmul.f32 %v348, 0.0625
        %v397 = vmul.f32 %v349, 0.0625
        %v398 = vmul.f32 %v350, 0.0625
        %v399 = vmul.f32 %v351, 0.0625
        %v400 = vmul.f32 %v352, 0.0625
        %v401 = vmul.f32 %v353, 0.0625
        %v402 = vmul.f32 %v354, 0.0625
        %v403 = vmul.f32 %v355, 0.0625
        %v404 = vmul.f32 %v356, 0.0625
        %v405 = vmul.f32 %v357, 0.0625
        %v406 = vmul.f32 %v358, 0.0625
        %v407 = vmul.f32 %v359, 0.0625
        %v408 = vmul.f32 %v360, 0.0625
        %v409 = vmul.f32 %v361, 0.0625
        %v410 = vmul.f32 %v362, 0.0625
        %v411 = vmul.f32 %v363, 0.0625
        %v412 = vmul.f32 %v380, 0.0625
        %v413 = vmul.f32 %v381, 0.0625
        %v414 = vmul.f32 %v382, 0.0625
        %v415 = vmul.f32 %v383, 0.0625
        %v416 = vmul.f32 %v384, 0.0625
        %v417 = vmul.f32 %v385, 0.0625
        %v418 = vmul.f32 %v386, 0.0625
        %v419 = vmul.f32 %v387, 0.0625
        %v420 = vmul.f32 %v388, 0.0625
        %v421 = vmul.f32 %v389, 0.0625
        %v422 = vmul.f32 %v390, 0.0625
        %v423 = vmul.f32 %v391, 0.0625
        %v424 = vmul.f32 %v392, 0.0625
        %v425 = vmul.f32 %v393, 0.0625
        %v426 = vmul.f32 %v394, 0.0625
        %v427 = vmul.f32 %v395, 0.0625
        %v428 = vld [vmem:[%s1] sm:$0x1]
        %v430 = vlaneseq
        %v431 = vshrl.u32 %v430, 7
        %v432 = vsub.s32 0, %v431
        %v433 = vrot.slane %v428, %v432
        %v435 = vmul.f32 %v396, %v433
        %v436 = vmul.f32 %v397, %v433
        %v437 = vmul.f32 %v398, %v433
        %v438 = vmul.f32 %v399, %v433
        %v439 = vmul.f32 %v400, %v433
        %v440 = vmul.f32 %v401, %v433
        %v441 = vmul.f32 %v402, %v433
        %v442 = vmul.f32 %v403, %v433
        %v443 = vmul.f32 %v404, %v433
        %v444 = vmul.f32 %v405, %v433
        %v445 = vmul.f32 %v406, %v433
        %v446 = vmul.f32 %v407, %v433
        %v447 = vmul.f32 %v408, %v433
        %v448 = vmul.f32 %v409, %v433
        %v449 = vmul.f32 %v410, %v433
        %v450 = vmul.f32 %v411, %v433
        %v451 = vld [vmem:[%s2] sm:$0x1]
        %v453 = vlaneseq
        %v454 = vshrl.u32 %v453, 7
        %v455 = vsub.s32 0, %v454
        %v456 = vrot.slane %v451, %v455
        %v458 = vmul.f32 %v412, %v456
        %v459 = vmul.f32 %v413, %v456
        %v460 = vmul.f32 %v414, %v456
        %v461 = vmul.f32 %v415, %v456
        %v462 = vmul.f32 %v416, %v456
        %v463 = vmul.f32 %v417, %v456
        %v464 = vmul.f32 %v418, %v456
        %v465 = vmul.f32 %v419, %v456
        %v466 = vmul.f32 %v420, %v456
        %v467 = vmul.f32 %v421, %v456
        %v468 = vmul.f32 %v422, %v456
        %v469 = vmul.f32 %v423, %v456
        %v470 = vmul.f32 %v424, %v456
        %v471 = vmul.f32 %v425, %v456
        %v472 = vmul.f32 %v426, %v456
        %v473 = vmul.f32 %v427, %v456
        %v474 = vadd.f32 %v435, %v458
        %v475 = vadd.f32 %v436, %v459
        %v476 = vadd.f32 %v437, %v460
        %v477 = vadd.f32 %v438, %v461
        %v478 = vadd.f32 %v439, %v462
        %v479 = vadd.f32 %v440, %v463
        %v480 = vadd.f32 %v441, %v464
        %v481 = vadd.f32 %v442, %v465
        %v482 = vadd.f32 %v443, %v466
        %v483 = vadd.f32 %v444, %v467
        %v484 = vadd.f32 %v445, %v468
        %v485 = vadd.f32 %v446, %v469
        %v486 = vadd.f32 %v447, %v470
        %v487 = vadd.f32 %v448, %v471
        %v488 = vadd.f32 %v449, %v472
        %v489 = vadd.f32 %v450, %v473
        %v490 = vld [vmem:[#allocation2] sm:$0x1]
        %v492 = vlaneseq
        %v493 = vshrl.u32 %v492, 7
        %v494 = vsub.s32 0, %v493
        %v495 = vrot.slane %v490, %v494
        %v497 = vadd.f32 %v474, %v495
        %v498 = vadd.f32 %v475, %v495
        %v499 = vadd.f32 %v476, %v495
        %v500 = vadd.f32 %v477, %v495
        %v501 = vadd.f32 %v478, %v495
        %v502 = vadd.f32 %v479, %v495
        %v503 = vadd.f32 %v480, %v495
        %v504 = vadd.f32 %v481, %v495
        %v505 = vadd.f32 %v482, %v495
        %v506 = vadd.f32 %v483, %v495
        %v507 = vadd.f32 %v484, %v495
        %v508 = vadd.f32 %v485, %v495
        %v509 = vadd.f32 %v486, %v495
        %v510 = vadd.f32 %v487, %v495
        %v511 = vadd.f32 %v488, %v495
        %v512 = vadd.f32 %v489, %v495
        %v513 = vmax.f32 %v497, 0.0
        %v514 = vmax.f32 %v498, 0.0
        %v515 = vmax.f32 %v499, 0.0
        %v516 = vmax.f32 %v500, 0.0
        %v517 = vmax.f32 %v501, 0.0
        %v518 = vmax.f32 %v502, 0.0
        %v519 = vmax.f32 %v503, 0.0
        %v520 = vmax.f32 %v504, 0.0
        %v521 = vmax.f32 %v505, 0.0
        %v522 = vmax.f32 %v506, 0.0
        %v523 = vmax.f32 %v507, 0.0
        %v524 = vmax.f32 %v508, 0.0
        %v525 = vmax.f32 %v509, 0.0
        %v526 = vmax.f32 %v510, 0.0
        %v527 = vmax.f32 %v511, 0.0
        %v528 = vmax.f32 %v512, 0.0
        %v529 = vld [vmem:[#allocation4] sm:$0xff]
        %v530 = vld [vmem:[#allocation4 + $0x8] sm:$0xff]
        %v531 = vld [vmem:[#allocation4 + $0x10] sm:$0xff]
        %v532 = vld [vmem:[#allocation4 + $0x18] sm:$0xff]
        %v533 = vld [vmem:[#allocation4 + $0x20] sm:$0xff]
        %v534 = vld [vmem:[#allocation4 + $0x28] sm:$0xff]
        %v535 = vld [vmem:[%s4] sm:$0x7]
        %v537 = vlaneseq
        %v538 = vshrl.u32 %v537, 7
        %v539 = vsub.s32 0, %v538
        %v540 = vrot.slane %v535, %v539
        %v541 = vlaneseq
        %v542 = vshrl.u32 %v541, 7
        %v543 = vsub.s32 1, %v542
        %v544 = vrot.slane %v535, %v543
        %v545 = vlaneseq
        %v546 = vshrl.u32 %v545, 7
        %v547 = vsub.s32 2, %v546
        %v548 = vrot.slane %v535, %v547
        %vm552 = vcmask 130048
        %v554 = vsel %vm552, %v513, 0
        %v557 = vsel %vm552, %v514, 0
        %v560 = vsel %vm552, %v515, 0
        %v563 = vsel %vm552, %v516, 0
        %v566 = vsel %vm552, %v517, 0
        %v569 = vsel %vm552, %v518, 0
        %v572 = vsel %vm552, %v519, 0
        %v575 = vsel %vm552, %v520, 0
        %v578 = vsel %vm552, %v521, 0
        %v581 = vsel %vm552, %v522, 0
        %v584 = vsel %vm552, %v523, 0
        %v587 = vsel %vm552, %v524, 0
        %v590 = vsel %vm552, %v525, 0
        %v593 = vsel %vm552, %v526, 0
        %v596 = vsel %vm552, %v527, 0
        %v599 = vsel %vm552, %v528, 0
        %601 = vmatprep.subr.mxu0 %v530
        %602 = vmatpush1.msra.mxu0 %v529
        %603 = vmatprep.subr.mxu0 %v533
        %604 = vmatpush1.msra.mxu0 %v532
        %605 = vmatprep.subr.mxu0 0.0
        %606 = vmatpush1.msra.mxu0 0.0
        %607 = vmatprep.subr.mxu0 0.0
        %608 = vmatpush1.msra.mxu0 0.0
        %609 = vmatprep.subr.mxu0 0.0
        %610 = vmatpush1.msra.mxu0 0.0
        %611 = vmatprep.subr.mxu0 0.0
        %612 = vmatpush1.msra.mxu0 0.0
        %613 = vmatprep.subr.mxu0 0.0
        %614 = vmatpush1.msra.mxu0 0.0
        %615 = vmatprep.subr.mxu0 0.0
        %616 = vmatpush1.msra.mxu0 0.0
        %617 = vmatprep.subr.mxu0 0.0
        %618 = vmatpush1.msra.mxu0 0.0
        %619 = vmatprep.subr.mxu0 0.0
        %620 = vmatpush1.msra.mxu0 0.0
        %621 = vmatprep.subr.mxu0 0.0
        %622 = vmatpush1.msra.mxu0 0.0
        %623 = vmatprep.subr.mxu0 0.0
        %624 = vmatpush1.msra.mxu0 0.0
        %625 = vmatprep.subr.mxu0 0.0
        %626 = vmatpush1.msra.mxu0 0.0
        %627 = vmatprep.subr.mxu0 0.0
        %628 = vmatpush1.msra.mxu0 0.0
        %629 = vmatprep.subr.mxu0 0.0
        %630 = vmatpush1.msra.mxu0 0.0
        %631 = vmatprep.subr.mxu0 0.0
        %632 = vmatpush1.msra.mxu0 0.0
        %633 = vmatprep.subr.mxu0 0.0
        %634 = vmatpush1.msra.mxu0 0.0
        %635 = vmatprep.subr.mxu0 0.0
        %636 = vmatpush1.msra.mxu0 0.0
        %637 = vmatprep.subr.mxu0 0.0
        %638 = vmatpush1.msra.mxu0 0.0
        %639 = vmatprep.subr.mxu0 0.0
        %640 = vmatpush1.msra.mxu0 0.0
        %641 = vmatprep.subr.mxu0 0.0
        %642 = vmatpush1.msra.mxu0 0.0
        %643 = vmatprep.subr.mxu0 0.0
        %644 = vmatpush1.msra.mxu0 0.0
        %645 = vmatprep.subr.mxu0 0.0
        %646 = vmatpush1.msra.mxu0 0.0
        %647 = vmatprep.subr.mxu0 0.0
        %648 = vmatpush1.msra.mxu0 0.0
        %649 = vmatprep.subr.mxu0 0.0
        %650 = vmatpush1.msra.mxu0 0.0
        %651 = vmatprep.subr.mxu0 0.0
        %652 = vmatpush1.msra.mxu0 0.0
        %653 = vmatprep.subr.mxu0 0.0
        %654 = vmatpush1.msra.mxu0 0.0
        %655 = vmatprep.subr.mxu0 0.0
        %656 = vmatpush1.msra.mxu0 0.0
        %657 = vmatprep.subr.mxu0 0.0
        %658 = vmatpush1.msra.mxu0 0.0
        %659 = vmatprep.subr.mxu0 0.0
        %660 = vmatpush1.msra.mxu0 0.0
        %661 = vmatprep.subr.mxu0 0.0
        %662 = vmatpush1.msra.mxu0 0.0
        %663 = vmatprep.subr.mxu0 0.0
        %664 = vmatpush1.msra.mxu0 0.0
        %665 = vmatprep.mubr.f32.mxu0 0.0
        %666 = vmatmul.mubr.f32.gmra.mrb[0].mxu0 %v554
        %v667 = vpop.f32.mrb[0].mxu0
        %v668 = vadd.f32 %v540, %v667
        %v669 = vpop.f32.mrb[0].mxu0
        %v670 = vadd.f32 %v544, %v669
        %671 = vmatprep.mubr.f32.mxu0 0.0
        %672 = vmatmul.mubr.f32.gmra.mrb[0].mxu0 %v557
        %v673 = vpop.f32.mrb[0].mxu0
        %v674 = vadd.f32 %v540, %v673
        %v675 = vpop.f32.mrb[0].mxu0
        %v676 = vadd.f32 %v544, %v675
        %677 = vmatprep.mubr.f32.mxu0 0.0
        %678 = vmatmul.mubr.f32.gmra.mrb[0].mxu0 %v560
        %v679 = vpop.f32.mrb[0].mxu0
        %v680 = vadd.f32 %v540, %v679
        %v681 = vpop.f32.mrb[0].mxu0
        %v682 = vadd.f32 %v544, %v681
        %683 = vmatprep.mubr.f32.mxu0 0.0
        %684 = vmatmul.mubr.f32.gmra.mrb[0].mxu0 %v563
        %v685 = vpop.f32.mrb[0].mxu0
        %v686 = vadd.f32 %v540, %v685
        %v687 = vpop.f32.mrb[0].mxu0
        %v688 = vadd.f32 %v544, %v687
        %689 = vmatprep.mubr.f32.mxu0 0.0
        %690 = vmatmul.mubr.f32.gmra.mrb[0].mxu0 %v566
        %v691 = vpop.f32.mrb[0].mxu0
        %v692 = vadd.f32 %v540, %v691
        %v693 = vpop.f32.mrb[0].mxu0
        %v694 = vadd.f32 %v544, %v693
        %695 = vmatprep.mubr.f32.mxu0 0.0
        %696 = vmatmul.mubr.f32.gmra.mrb[0].mxu0 %v569
        %v697 = vpop.f32.mrb[0].mxu0
        %v698 = vadd.f32 %v540, %v697
        %v699 = vpop.f32.mrb[0].mxu0
        %v700 = vadd.f32 %v544, %v699
        %701 = vmatprep.mubr.f32.mxu0 0.0
        %702 = vmatmul.mubr.f32.gmra.mrb[0].mxu0 %v572
        %v703 = vpop.f32.mrb[0].mxu0
        %v704 = vadd.f32 %v540, %v703
        %v705 = vpop.f32.mrb[0].mxu0
        %v706 = vadd.f32 %v544, %v705
        %707 = vmatprep.mubr.f32.mxu0 0.0
        %708 = vmatmul.mubr.f32.gmra.mrb[0].mxu0 %v575
        %v709 = vpop.f32.mrb[0].mxu0
        %v710 = vadd.f32 %v540, %v709
        %v711 = vpop.f32.mrb[0].mxu0
        %v712 = vadd.f32 %v544, %v711
        %713 = vmatprep.mubr.f32.mxu0 0.0
        %714 = vmatmul.mubr.f32.gmra.mrb[0].mxu0 %v578
        %v715 = vpop.f32.mrb[0].mxu0
        %v716 = vadd.f32 %v540, %v715
        %v717 = vpop.f32.mrb[0].mxu0
        %v718 = vadd.f32 %v544, %v717
        %719 = vmatprep.mubr.f32.mxu0 0.0
        %720 = vmatmul.mubr.f32.gmra.mrb[0].mxu0 %v581
        %v721 = vpop.f32.mrb[0].mxu0
        %v722 = vadd.f32 %v540, %v721
        %v723 = vpop.f32.mrb[0].mxu0
        %v724 = vadd.f32 %v544, %v723
        %725 = vmatprep.mubr.f32.mxu0 0.0
        %726 = vmatmul.mubr.f32.gmra.mrb[0].mxu0 %v584
        %v727 = vpop.f32.mrb[0].mxu0
        %v728 = vadd.f32 %v540, %v727
        %v729 = vpop.f32.mrb[0].mxu0
        %v730 = vadd.f32 %v544, %v729
        %731 = vmatprep.mubr.f32.mxu0 0.0
        %732 = vmatmul.mubr.f32.gmra.mrb[0].mxu0 %v587
        %v733 = vpop.f32.mrb[0].mxu0
        %v734 = vadd.f32 %v540, %v733
        %v735 = vpop.f32.mrb[0].mxu0
        %v736 = vadd.f32 %v544, %v735
        %737 = vmatprep.mubr.f32.mxu0 0.0
        %738 = vmatmul.mubr.f32.gmra.mrb[0].mxu0 %v590
        %v739 = vpop.f32.mrb[0].mxu0
        %v740 = vadd.f32 %v540, %v739
        %v741 = vpop.f32.mrb[0].mxu0
        %v742 = vadd.f32 %v544, %v741
        %743 = vmatprep.mubr.f32.mxu0 0.0
        %744 = vmatmul.mubr.f32.gmra.mrb[0].mxu0 %v593
        %v745 = vpop.f32.mrb[0].mxu0
        %v746 = vadd.f32 %v540, %v745
        %v747 = vpop.f32.mrb[0].mxu0
        %v748 = vadd.f32 %v544, %v747
        %749 = vmatprep.mubr.f32.mxu0 0.0
        %750 = vmatmul.mubr.f32.gmra.mrb[0].mxu0 %v596
        %v751 = vpop.f32.mrb[0].mxu0
        %v752 = vadd.f32 %v540, %v751
        %v753 = vpop.f32.mrb[0].mxu0
        %v754 = vadd.f32 %v544, %v753
        %755 = vmatprep.mubr.f32.mxu0 0.0
        %756 = vmatmul.mubr.f32.gmra.mrb[0].mxu0 %v599
        %v757 = vpop.f32.mrb[0].mxu0
        %v758 = vadd.f32 %v540, %v757
        %v759 = vpop.f32.mrb[0].mxu0
        %v760 = vadd.f32 %v544, %v759
        %761 = vdwg.mxu0
        %762 = vmatprep.subr.mxu0 0.0
        %763 = vmatpush1.msra.mxu0 %v531
        %764 = vmatprep.subr.mxu0 0.0
        %765 = vmatpush1.msra.mxu0 %v534
        %766 = vmatprep.subr.mxu0 0.0
        %767 = vmatpush1.msra.mxu0 0.0
        %768 = vmatprep.subr.mxu0 0.0
        %769 = vmatpush1.msra.mxu0 0.0
        %770 = vmatprep.subr.mxu0 0.0
        %771 = vmatpush1.msra.mxu0 0.0
        %772 = vmatprep.subr.mxu0 0.0
        %773 = vmatpush1.msra.mxu0 0.0
        %774 = vmatprep.subr.mxu0 0.0
        %775 = vmatpush1.msra.mxu0 0.0
        %776 = vmatprep.subr.mxu0 0.0
        %777 = vmatpush1.msra.mxu0 0.0
        %778 = vmatprep.subr.mxu0 0.0
        %779 = vmatpush1.msra.mxu0 0.0
        %780 = vmatprep.subr.mxu0 0.0
        %781 = vmatpush1.msra.mxu0 0.0
        %782 = vmatprep.subr.mxu0 0.0
        %783 = vmatpush1.msra.mxu0 0.0
        %784 = vmatprep.subr.mxu0 0.0
        %785 = vmatpush1.msra.mxu0 0.0
        %786 = vmatprep.subr.mxu0 0.0
        %787 = vmatpush1.msra.mxu0 0.0
        %788 = vmatprep.subr.mxu0 0.0
        %789 = vmatpush1.msra.mxu0 0.0
        %790 = vmatprep.subr.mxu0 0.0
        %791 = vmatpush1.msra.mxu0 0.0
        %792 = vmatprep.subr.mxu0 0.0
        %793 = vmatpush1.msra.mxu0 0.0
        %794 = vmatprep.subr.mxu0 0.0
        %795 = vmatpush1.msra.mxu0 0.0
        %796 = vmatprep.subr.mxu0 0.0
        %797 = vmatpush1.msra.mxu0 0.0
        %798 = vmatprep.subr.mxu0 0.0
        %799 = vmatpush1.msra.mxu0 0.0
        %800 = vmatprep.subr.mxu0 0.0
        %801 = vmatpush1.msra.mxu0 0.0
        %802 = vmatprep.subr.mxu0 0.0
        %803 = vmatpush1.msra.mxu0 0.0
        %804 = vmatprep.subr.mxu0 0.0
        %805 = vmatpush1.msra.mxu0 0.0
        %806 = vmatprep.subr.mxu0 0.0
        %807 = vmatpush1.msra.mxu0 0.0
        %808 = vmatprep.subr.mxu0 0.0
        %809 = vmatpush1.msra.mxu0 0.0
        %810 = vmatprep.subr.mxu0 0.0
        %811 = vmatpush1.msra.mxu0 0.0
        %812 = vmatprep.subr.mxu0 0.0
        %813 = vmatpush1.msra.mxu0 0.0
        %814 = vmatprep.subr.mxu0 0.0
        %815 = vmatpush1.msra.mxu0 0.0
        %816 = vmatprep.subr.mxu0 0.0
        %817 = vmatpush1.msra.mxu0 0.0
        %818 = vmatprep.subr.mxu0 0.0
        %819 = vmatpush1.msra.mxu0 0.0
        %820 = vmatprep.subr.mxu0 0.0
        %821 = vmatpush1.msra.mxu0 0.0
        %822 = vmatprep.subr.mxu0 0.0
        %823 = vmatpush1.msra.mxu0 0.0
        %824 = vmatprep.subr.mxu0 0.0
        %825 = vmatpush1.msra.mxu0 0.0
        %826 = vmatprep.mubr.f32.mxu0 0.0
        %827 = vmatmul.mubr.f32.gmra.mrb[0].mxu0 %v554
        %v828 = vpop.f32.mrb[0].mxu0
        %v829 = vadd.f32 %v548, %v828
        %v830 = vpop.f32.mrb[0].mxu0
        %831 = vmatprep.mubr.f32.mxu0 0.0
        %832 = vmatmul.mubr.f32.gmra.mrb[0].mxu0 %v557
        %v833 = vpop.f32.mrb[0].mxu0
        %v834 = vadd.f32 %v548, %v833
        %v835 = vpop.f32.mrb[0].mxu0
        %836 = vmatprep.mubr.f32.mxu0 0.0
        %837 = vmatmul.mubr.f32.gmra.mrb[0].mxu0 %v560
        %v838 = vpop.f32.mrb[0].mxu0
        %v839 = vadd.f32 %v548, %v838
        %v840 = vpop.f32.mrb[0].mxu0
        %841 = vmatprep.mubr.f32.mxu0 0.0
        %842 = vmatmul.mubr.f32.gmra.mrb[0].mxu0 %v563
        %v843 = vpop.f32.mrb[0].mxu0
        %v844 = vadd.f32 %v548, %v843
        %v845 = vpop.f32.mrb[0].mxu0
        %846 = vmatprep.mubr.f32.mxu0 0.0
        %847 = vmatmul.mubr.f32.gmra.mrb[0].mxu0 %v566
        %v848 = vpop.f32.mrb[0].mxu0
        %v849 = vadd.f32 %v548, %v848
        %v850 = vpop.f32.mrb[0].mxu0
        %851 = vmatprep.mubr.f32.mxu0 0.0
        %852 = vmatmul.mubr.f32.gmra.mrb[0].mxu0 %v569
        %v853 = vpop.f32.mrb[0].mxu0
        %v854 = vadd.f32 %v548, %v853
        %v855 = vpop.f32.mrb[0].mxu0
        %856 = vmatprep.mubr.f32.mxu0 0.0
        %857 = vmatmul.mubr.f32.gmra.mrb[0].mxu0 %v572
        %v858 = vpop.f32.mrb[0].mxu0
        %v859 = vadd.f32 %v548, %v858
        %v860 = vpop.f32.mrb[0].mxu0
        %861 = vmatprep.mubr.f32.mxu0 0.0
        %862 = vmatmul.mubr.f32.gmra.mrb[0].mxu0 %v575
        %v863 = vpop.f32.mrb[0].mxu0
        %v864 = vadd.f32 %v548, %v863
        %v865 = vpop.f32.mrb[0].mxu0
        %866 = vmatprep.mubr.f32.mxu0 0.0
        %867 = vmatmul.mubr.f32.gmra.mrb[0].mxu0 %v578
        %v868 = vpop.f32.mrb[0].mxu0
        %v869 = vadd.f32 %v548, %v868
        %v870 = vpop.f32.mrb[0].mxu0
        %871 = vmatprep.mubr.f32.mxu0 0.0
        %872 = vmatmul.mubr.f32.gmra.mrb[0].mxu0 %v581
        %v873 = vpop.f32.mrb[0].mxu0
        %v874 = vadd.f32 %v548, %v873
        %v875 = vpop.f32.mrb[0].mxu0
        %876 = vmatprep.mubr.f32.mxu0 0.0
        %877 = vmatmul.mubr.f32.gmra.mrb[0].mxu0 %v584
        %v878 = vpop.f32.mrb[0].mxu0
        %v879 = vadd.f32 %v548, %v878
        %v880 = vpop.f32.mrb[0].mxu0
        %881 = vmatprep.mubr.f32.mxu0 0.0
        %882 = vmatmul.mubr.f32.gmra.mrb[0].mxu0 %v587
        %v883 = vpop.f32.mrb[0].mxu0
        %v884 = vadd.f32 %v548, %v883
        %v885 = vpop.f32.mrb[0].mxu0
        %886 = vmatprep.mubr.f32.mxu0 0.0
        %887 = vmatmul.mubr.f32.gmra.mrb[0].mxu0 %v590
        %v888 = vpop.f32.mrb[0].mxu0
        %v889 = vadd.f32 %v548, %v888
        %v890 = vpop.f32.mrb[0].mxu0
        %891 = vmatprep.mubr.f32.mxu0 0.0
        %892 = vmatmul.mubr.f32.gmra.mrb[0].mxu0 %v593
        %v893 = vpop.f32.mrb[0].mxu0
        %v894 = vadd.f32 %v548, %v893
        %v895 = vpop.f32.mrb[0].mxu0
        %896 = vmatprep.mubr.f32.mxu0 0.0
        %897 = vmatmul.mubr.f32.gmra.mrb[0].mxu0 %v596
        %v898 = vpop.f32.mrb[0].mxu0
        %v899 = vadd.f32 %v548, %v898
        %v900 = vpop.f32.mrb[0].mxu0
        %901 = vmatprep.mubr.f32.mxu0 0.0
        %902 = vmatmul.mubr.f32.gmra.mrb[0].mxu0 %v599
        %v903 = vpop.f32.mrb[0].mxu0
        %v904 = vadd.f32 %v548, %v903
        %v905 = vpop.f32.mrb[0].mxu0
        %906 = vdwg.mxu0
        %907 = vst [vmem:[%s263] sm:$0xff] %v668
        %908 = vst [vmem:[%s263 + $0x8] sm:$0xff] %v670
        %vm909 = vcmask 261120
        %910 = vst.msk [vmem:[%s263 + $0x10] sm:$0xff] %vm909, %v829
        %911 = vst [vmem:[%s263 + $0x18] sm:$0xff] %v674
        %912 = vst [vmem:[%s263 + $0x20] sm:$0xff] %v676
        %913 = vst.msk [vmem:[%s263 + $0x28] sm:$0xff] %vm909, %v834
        %914 = vst [vmem:[%s263 + $0x30] sm:$0xff] %v680
        %915 = vst [vmem:[%s263 + $0x38] sm:$0xff] %v682
        %916 = vst.msk [vmem:[%s263 + $0x40] sm:$0xff] %vm909, %v839
        %917 = vst [vmem:[%s263 + $0x48] sm:$0xff] %v686
        %918 = vst [vmem:[%s263 + $0x50] sm:$0xff] %v688
        %919 = vst.msk [vmem:[%s263 + $0x58] sm:$0xff] %vm909, %v844
        %920 = vst [vmem:[%s263 + $0x60] sm:$0xff] %v692
        %921 = vst [vmem:[%s263 + $0x68] sm:$0xff] %v694
        %922 = vst.msk [vmem:[%s263 + $0x70] sm:$0xff] %vm909, %v849
        %923 = vst [vmem:[%s263 + $0x78] sm:$0xff] %v698
        %924 = vst [vmem:[%s263 + $0x80] sm:$0xff] %v700
        %925 = vst.msk [vmem:[%s263 + $0x88] sm:$0xff] %vm909, %v854
        %926 = vst [vmem:[%s263 + $0x90] sm:$0xff] %v704
        %927 = vst [vmem:[%s263 + $0x98] sm:$0xff] %v706
        %928 = vst.msk [vmem:[%s263 + $0xa0] sm:$0xff] %vm909, %v859
        %929 = vst [vmem:[%s263 + $0xa8] sm:$0xff] %v710
        %930 = vst [vmem:[%s263 + $0xb0] sm:$0xff] %v712
        %931 = vst.msk [vmem:[%s263 + $0xb8] sm:$0xff] %vm909, %v864
        %932 = vst [vmem:[%s263 + $0xc0] sm:$0xff] %v716
        %933 = vst [vmem:[%s263 + $0xc8] sm:$0xff] %v718
        %934 = vst.msk [vmem:[%s263 + $0xd0] sm:$0xff] %vm909, %v869
        %935 = vst [vmem:[%s263 + $0xd8] sm:$0xff] %v722
        %936 = vst [vmem:[%s263 + $0xe0] sm:$0xff] %v724
        %937 = vst.msk [vmem:[%s263 + $0xe8] sm:$0xff] %vm909, %v874
        %938 = vst [vmem:[%s263 + $0xf0] sm:$0xff] %v728
        %939 = vst [vmem:[%s263 + $0xf8] sm:$0xff] %v730
        %940 = vst.msk [vmem:[%s263 + $0x100] sm:$0xff] %vm909, %v879
        %941 = vst [vmem:[%s263 + $0x108] sm:$0xff] %v734
        %942 = vst [vmem:[%s263 + $0x110] sm:$0xff] %v736
        %943 = vst.msk [vmem:[%s263 + $0x118] sm:$0xff] %vm909, %v884
        %944 = vst [vmem:[%s263 + $0x120] sm:$0xff] %v740
        %945 = vst [vmem:[%s263 + $0x128] sm:$0xff] %v742
        %946 = vst.msk [vmem:[%s263 + $0x130] sm:$0xff] %vm909, %v889
        %947 = vst [vmem:[%s263 + $0x138] sm:$0xff] %v746
        %948 = vst [vmem:[%s263 + $0x140] sm:$0xff] %v748
        %949 = vst.msk [vmem:[%s263 + $0x148] sm:$0xff] %vm909, %v894
        %950 = vst [vmem:[%s263 + $0x150] sm:$0xff] %v752
        %951 = vst [vmem:[%s263 + $0x158] sm:$0xff] %v754
        %952 = vst.msk [vmem:[%s263 + $0x160] sm:$0xff] %vm909, %v899
        %953 = vst [vmem:[%s263 + $0x168] sm:$0xff] %v758
        %954 = vst [vmem:[%s263 + $0x170] sm:$0xff] %v760
        %955 = vst.msk [vmem:[%s263 + $0x178] sm:$0xff] %vm909, %v904
        %s956 = smul.u32 16, %s23
        %p957 = scmp.lt.s32.totalorder %s22, 0
        %s958 = scalar_select %p957, %s22, 0
        %p959 = scmp.lt.s32.totalorder %s956, 31
        %s960 = scalar_select %p959, %s956, 31
        %s961 = smul.addr %s960, 3
        %s962 = smul.addr %s958, 96
        %s963 = sadd.s32 %s961, %s962
        %s964 = smul.addr %s963, 8
        %s965 = scalar_lea.vmem %s5, %s964
        // Predicated region
        $region49: #{tpu_custom_call.1} parent=39 // pred_check
          %p966 = pneg %p160
        $region50: #{tpu_custom_call.1} parent=39 // pred_check_branch
          %968 = sbr.rel (%p966) target = $region52
        $region51: #{tpu_custom_call.1} parent=39 // pred_region
          %s969 = smul.u32 16, %s23
        $region52: #{tpu_custom_call.1} parent=39 // pred_fallthru
          _
      $region40: #{tpu_custom_call.1} parent=5 // pred_fallthru
        _
      %p970 = scmp.le.s32.totalorder 2, %s13
      // Predicated region
      $region53: #{tpu_custom_call.1} parent=5 // pred_check
        %p971 = pneg %p970
      $region54: #{tpu_custom_call.1} parent=5 // pred_check_branch
        %973 = sbr.rel (%p971) target = $region56
      $region55: #{tpu_custom_call.1} parent=5 // pred_region
        %s974 = ssub.s32 %s13, 2
        // Predicated region
        $region57: #{tpu_custom_call.1} parent=55 // pred_check
          %p975 = pneg %p166
        $region58: #{tpu_custom_call.1} parent=55 // pred_check_branch
          %977 = sbr.rel (%p975) target = $region60
        $region59: #{tpu_custom_call.1} parent=55 // pred_region
          %s978 = smul.u32 16, %s25
          %p979 = scmp.lt.s32.totalorder %s24, 0
          %s980 = scalar_select %p979, %s24, 0
          %p981 = scmp.lt.s32.totalorder %s978, 31
          %s982 = scalar_select %p981, %s978, 31
          %s983 = smul.addr %s982, 3
          %s984 = smul.addr %s980, 96
          %s985 = sadd.s32 %s983, %s984
          %s986 = smul.addr %s985, 8
          %s987 = scalar_lea.vmem %s5, %s986
        $region60: #{tpu_custom_call.1} parent=55 // pred_fallthru
          _
      $region56: #{tpu_custom_call.1} parent=5 // pred_fallthru
        _
    $region6: #{tpu_custom_call.1} parent=1 // loop_footer
      %s17 = sadd.s32 1, %s13
    $region7: #{tpu_custom_call.1} parent=1 // loop_footer_branch
      %12 = sbr.rel target = $region3
    $region8: #{tpu_custom_call.1} parent=1 // loop_exit
      _
    %988 = vsyncpa [#allocation3], 1
    %s989 = scalar_lea.sflag [#allocation3], 1
    %990 = vsyncpa %s989, 1
    %991 = vsyncpa [#allocation5], 1

</llo_original>
